<compile_context>
chip_gen: v5e
topology: v5e:2x2
jax: 0.10.0
libtpu: 0.0.40
codegen_flags: <defaults>
</compile_context>

<pallas_src>
import functools

import jax
import jax.numpy as jnp
from jax.experimental import pallas as pl
from jax.experimental.pallas import tpu as pltpu

_MIB = 1024 * 1024


def _weighted_entropy_ce_kernel(x_ref, y_ref, w_ref, out_ref, *,
                                e_lambda, n, tile_n):
    t = pl.program_id(0)          # batch-tile index ("arbitrary" / reduction)

    # Init the resident accumulator block at the start of the sweep.
    @pl.when(t == 0)
    def _():
        out_ref[...] = jnp.zeros_like(out_ref)

    x = x_ref[...].astype(jnp.float32)      # (tile_n, C) logits, upcast in-kernel
    y = y_ref[...]                          # (tile_n, 1) int32 labels
    w = w_ref[...].astype(jnp.float32)      # (tile_n, 1) per-sample weight

    tn, c = x.shape

    # Numerically stable softmax pieces -- one exp over the tile; everything
    # else per-row.  No (tile_n, C) softmax tensor is materialized.
    m = jnp.max(x, axis=-1, keepdims=True)                    # (tile_n, 1)
    z = x - m                                                 # (tile_n, C)
    ez = jnp.exp(z)                                           # only N*C transcendental
    sum_ez = jnp.sum(ez, axis=-1, keepdims=True)              # (tile_n, 1)
    sum_ez_z = jnp.sum(ez * z, axis=-1, keepdims=True)        # (tile_n, 1)
    lse = jnp.log(sum_ez)                                     # (tile_n, 1)

    # entropy = -sum(p * logp) = lse - sum(p*z);  p = ez / sum_ez
    # reciprocal only on the (tile_n, 1) row vector.
    entropy = lse - sum_ez_z * pl.reciprocal(sum_ez, approx=False)

    # ce = -logp[y] = lse - z[row, y[row]]  via masked select (no gather,
    # no one-hot cast + multiply).
    col = jax.lax.broadcasted_iota(jnp.int32, (tn, c), 1)     # (tile_n, C)
    zy = jnp.sum(jnp.where(col == y, z, 0.0), axis=-1, keepdims=True)
    ce = lse - zy                                             # (tile_n, 1)

    per_row = ce - (e_lambda * w) * entropy                   # (tile_n, 1)

    # Tail mask: rows past N hold garbage logits (possibly inf/NaN after exp);
    # the select keeps them out of the accumulator entirely.
    rows = t * tile_n + jax.lax.broadcasted_iota(jnp.int32, (tn, 1), 0)
    per_row = jnp.where(rows < n, per_row, 0.0)

    # Accumulate this tile's partial sum into the lane-dense output block.
    out_ref[...] += jnp.sum(per_row)


def _vmem_capacity_bytes():
    try:
        return int(pltpu.get_tpu_info().vmem_capacity_bytes)
    except Exception:
        return 64 * _MIB          # conservative fallback (v7x per-TensorCore)


def _choose_tile_n(n, c, itemsize, block_budget):
    """Largest batch tile that fits the VMEM block budget.

    Counts the double-buffered x block plus the lane-padded (tile_n, 1) y/w
    blocks (each padded to 128 lanes -> 512 B/row/buffer)."""
    sublane = max(8, 32 // max(1, itemsize))     # f32: 8, bf16: 16, int8/fp8: 32
    per_row = 2 * c * itemsize + 4 * 512         # 2x x-buffers + 2x2 y/w buffers
    cap = block_budget // max(1, per_row)
    cap = min(cap, 4096)                                   # step overhead amortized
    cap = min(cap, (16 * _MIB) // max(1, c * itemsize))    # per-x-buffer ceiling
    cap = max(sublane, (cap // sublane) * sublane)
    if n <= cap:
        return n          # single tile == full array dim (always legal)
    return cap


def weighted_entropy_ce(x_input, y_target, weight, e_lambda=1.0):
    """x_input: (N, C) logits (any float dtype); y_target: (N,) int; weight: (N,) float."""
    n, c = x_input.shape
    y2d = y_target.reshape(n, 1).astype(jnp.int32)
    w2d = weight.reshape(n, 1).astype(jnp.float32)

    itemsize = jnp.dtype(x_input.dtype).itemsize

    # Generation-aware VMEM budget: ~3/4 of physical as the scoped limit
    # (96 MiB on 128-MiB chips, 48 MiB on v7x's 64 MiB per TC), with headroom
    # for the output block and compiler-internal scratch.
    vmem_cap = _vmem_capacity_bytes()
    vmem_limit = min((vmem_cap * 3) // 4, 96 * _MIB)
    block_budget = max(8 * _MIB, vmem_limit - 8 * _MIB)

    tile_n = _choose_tile_n(n, c, itemsize, block_budget)
    num_tiles = pl.cdiv(n, tile_n)

    kernel = functools.partial(
        _weighted_entropy_ce_kernel,
        e_lambda=float(e_lambda), n=n, tile_n=tile_n)

    out = pl.pallas_call(
        kernel,
        out_shape=jax.ShapeDtypeStruct((8, 128), jnp.float32),
        grid_spec=pltpu.PrefetchScalarGridSpec(
            num_scalar_prefetch=0,
            grid=(num_tiles,),
            in_specs=[
                pl.BlockSpec((tile_n, c), lambda t: (t, 0)),   # x (native dtype)
                pl.BlockSpec((tile_n, 1), lambda t: (t, 0)),   # y int32
                pl.BlockSpec((tile_n, 1), lambda t: (t, 0)),   # w float32
            ],
            out_specs=pl.BlockSpec((8, 128), lambda t: (0, 0)),
        ),
        compiler_params=pltpu.CompilerParams(
            dimension_semantics=("arbitrary",),
            vmem_limit_bytes=int(vmem_limit)),
        cost_estimate=pl.CostEstimate(
            flops=6 * n * c,
            transcendentals=n * c + n,
            bytes_accessed=n * c * itemsize + 8 * n + 8 * 128 * 4),
    )(x_input, y2d, w2d)

    return out[0, 0] / jnp.float32(n)


def _reference(x, y, w, e_lambda=1.0):
    logp = jax.nn.log_softmax(x.astype(jnp.float32), axis=-1)
    p = jax.nn.softmax(x.astype(jnp.float32), axis=-1)
    entropy = -jnp.sum(p * logp, axis=1).reshape(-1, 1)
    entropy = (e_lambda * w.reshape(-1, 1)) * entropy
    ce = -jnp.take_along_axis(logp, y.reshape(-1, 1), axis=1)
    return jnp.mean(ce) - jnp.mean(entropy)


if __name__ == "__main__":
    key = jax.random.PRNGKey(0)

    # Case 1: batch of 16 samples, 128 classes (float32).
    kx, ky, kw = jax.random.split(key, 3)
    N, C = 16, 128
    x = jax.random.normal(kx, (N, C), dtype=jnp.float32)
    y = jax.random.randint(ky, (N,), 0, C, dtype=jnp.int32)
    w = jax.random.uniform(kw, (N,), dtype=jnp.float32)

    loss = jax.block_until_ready(weighted_entropy_ce(x, y, w, e_lambda=1.0))
    ref = _reference(x, y, w, e_lambda=1.0)
    assert jnp.allclose(loss, ref, atol=1e-5, rtol=1e-5), (loss, ref)

    # Case 2: non-power-of-two class count, different e_lambda.
    kx2, ky2, kw2 = jax.random.split(jax.random.PRNGKey(1), 3)
    N2, C2 = 24, 96
    x2 = jax.random.normal(kx2, (N2, C2), dtype=jnp.float32)
    y2 = jax.random.randint(ky2, (N2,), 0, C2, dtype=jnp.int32)
    w2 = jax.random.uniform(kw2, (N2,), dtype=jnp.float32)

    loss2 = jax.block_until_ready(weighted_entropy_ce(x2, y2, w2, e_lambda=0.5))
    ref2 = _reference(x2, y2, w2, e_lambda=0.5)
    assert jnp.allclose(loss2, ref2, atol=1e-5, rtol=1e-5), (loss2, ref2)

    print("KERNEL_OK")
</pallas_src>

<mosaic_0001>
module attributes {stable_mosaic.version = 11 : i64} {
  func.func @_weighted_entropy_ce_kernel(%arg0: i32, %arg1: memref<16x128xf32, #tpu.memory_space<vmem>>, %arg2: memref<16x1xi32, #tpu.memory_space<vmem>>, %arg3: memref<16x1xf32, #tpu.memory_space<vmem>>, %arg4: memref<8x128xf32, #tpu.memory_space<vmem>>) attributes {dimension_semantics = [#tpu.dimension_semantics<arbitrary>], iteration_bounds = array<i64: 1>, scalar_prefetch = 0 : i64, scratch_operands = 0 : i64, tpu.core_type = #tpu.core_type<tc>, window_params = [{transform_indices = @transform_0, window_bounds = array<i64: 16, 128>}, {transform_indices = @transform_1, window_bounds = array<i64: 16, 1>}, {transform_indices = @transform_2, window_bounds = array<i64: 16, 1>}, {pipeline_mode = #tpu.pipeline_mode<synchronous>, transform_indices = @transform_3, window_bounds = array<i64: 8, 128>}]} {
    %c0_i32 = arith.constant 0 : i32
    %0 = arith.cmpi eq, %arg0, %c0_i32 : i32
    %1 = arith.extui %0 : i1 to i32
    %c0_i32_0 = arith.constant 0 : i32
    %2 = arith.cmpi ne, %1, %c0_i32_0 : i32
    scf.if %2 {
      %cst_18 = arith.constant 0.000000e+00 : f32
      %48 = vector.broadcast %cst_18 : f32 to vector<8x128xf32>
      %c0_19 = arith.constant 0 : index
      %c0_20 = arith.constant 0 : index
      %49 = vector.load %arg4[%c0_19, %c0_20] : memref<8x128xf32, #tpu.memory_space<vmem>>, vector<8x128xf32>
      tpu.vector_store %arg4[%c0_19, %c0_20], %48 {strides = array<i32>} : memref<8x128xf32, #tpu.memory_space<vmem>>, vector<8x128xf32>,
    } else {
    }
    %c0 = arith.constant 0 : index
    %c0_1 = arith.constant 0 : index
    %3 = vector.load %arg1[%c0, %c0_1] : memref<16x128xf32, #tpu.memory_space<vmem>>, vector<16x128xf32>
    %c0_2 = arith.constant 0 : index
    %c0_3 = arith.constant 0 : index
    %4 = vector.load %arg2[%c0_2, %c0_3] : memref<16x1xi32, #tpu.memory_space<vmem>>, vector<16x1xi32>
    %c0_4 = arith.constant 0 : index
    %c0_5 = arith.constant 0 : index
    %5 = vector.load %arg3[%c0_4, %c0_5] : memref<16x1xf32, #tpu.memory_space<vmem>>, vector<16x1xf32>
    %cst = arith.constant dense<0xFF800000> : vector<16xf32>
    %6 = vector.multi_reduction <maximumf>, %3, %cst [1] : vector<16x128xf32> to vector<16xf32>
    %7 = vector.shape_cast %6 : vector<16xf32> to vector<16x1xf32>
    %8 = vector.broadcast %7 : vector<16x1xf32> to vector<16x128xf32>
    %9 = arith.subf %3, %8 : vector<16x128xf32>
    %10 = math.exp %9 : vector<16x128xf32>
    %cst_6 = arith.constant dense<0.000000e+00> : vector<16xf32>
    %11 = vector.multi_reduction <add>, %10, %cst_6 [1] : vector<16x128xf32> to vector<16xf32>
    %12 = vector.shape_cast %11 : vector<16xf32> to vector<16x1xf32>
    %13 = arith.mulf %10, %9 : vector<16x128xf32>
    %cst_7 = arith.constant dense<0.000000e+00> : vector<16xf32>
    %14 = vector.multi_reduction <add>, %13, %cst_7 [1] : vector<16x128xf32> to vector<16xf32>
    %15 = vector.shape_cast %14 : vector<16xf32> to vector<16x1xf32>
    %16 = math.log %12 : vector<16x1xf32>
    %17 = tpu.reciprocal %12 : vector<16x1xf32> -> vector<16x1xf32>
    %18 = arith.mulf %15, %17 : vector<16x1xf32>
    %19 = arith.subf %16, %18 : vector<16x1xf32>
    %20 = tpu.iota {dimensions = array<i32: 1>} : vector<16x128xi32>
    %21 = vector.broadcast %4 : vector<16x1xi32> to vector<16x128xi32>
    %22 = arith.cmpi eq, %20, %21 : vector<16x128xi32>
    %cst_8 = arith.constant 0.000000e+00 : f32
    %23 = vector.broadcast %cst_8 : f32 to vector<16x128xf32>
    %24 = arith.select %22, %9, %23 : vector<16x128xi1>, vector<16x128xf32>
    %cst_9 = arith.constant dense<0.000000e+00> : vector<16xf32>
    %25 = vector.multi_reduction <add>, %24, %cst_9 [1] : vector<16x128xf32> to vector<16xf32>
    %26 = vector.shape_cast %25 : vector<16xf32> to vector<16x1xf32>
    %27 = arith.subf %16, %26 : vector<16x1xf32>
    %cst_10 = arith.constant 1.000000e+00 : f32
    %28 = vector.broadcast %cst_10 : f32 to vector<16x1xf32>
    %29 = arith.mulf %28, %5 : vector<16x1xf32>
    %30 = arith.mulf %29, %19 : vector<16x1xf32>
    %31 = arith.subf %27, %30 : vector<16x1xf32>
    %c16_i32 = arith.constant 16 : i32
    %32 = arith.muli %arg0, %c16_i32 : i32
    %33 = tpu.iota {dimensions = array<i32: 0>} : vector<16x1xi32>
    %34 = vector.broadcast %32 : i32 to vector<16x1xi32>
    %35 = arith.addi %34, %33 : vector<16x1xi32>
    %c16_i32_11 = arith.constant 16 : i32
    %36 = vector.broadcast %c16_i32_11 : i32 to vector<16x1xi32>
    %37 = arith.cmpi slt, %35, %36 : vector<16x1xi32>
    %cst_12 = arith.constant 0.000000e+00 : f32
    %38 = vector.broadcast %cst_12 : f32 to vector<16x1xf32>
    %39 = arith.select %37, %31, %38 : vector<16x1xi1>, vector<16x1xf32>
    %c0_13 = arith.constant 0 : index
    %c0_14 = arith.constant 0 : index
    %40 = vector.load %arg4[%c0_13, %c0_14] : memref<8x128xf32, #tpu.memory_space<vmem>>, vector<8x128xf32>
    %41 = vector.shape_cast %39 : vector<16x1xf32> to vector<1x16x1xf32>
    %cst_15 = arith.constant dense<0.000000e+00> : vector<1xf32>
    %42 = vector.multi_reduction <add>, %41, %cst_15 [1, 2] : vector<1x16x1xf32> to vector<1xf32>
    %43 = vector.shape_cast %42 : vector<1xf32> to vector<1x1x1xf32>
    %44 = vector.extract %43[0, 0, 0] : f32 from vector<1x1x1xf32>
    %45 = vector.broadcast %44 : f32 to vector<8x128xf32>
    %46 = arith.addf %40, %45 : vector<8x128xf32>
    %c0_16 = arith.constant 0 : index
    %c0_17 = arith.constant 0 : index
    %47 = vector.load %arg4[%c0_16, %c0_17] : memref<8x128xf32, #tpu.memory_space<vmem>>, vector<8x128xf32>
    tpu.vector_store %arg4[%c0_16, %c0_17], %46 {strides = array<i32>} : memref<8x128xf32, #tpu.memory_space<vmem>>, vector<8x128xf32>,
    return
  }
  func.func @transform_0(%arg0: i32) -> (i32, i32) {
    %c0_i32 = arith.constant 0 : i32
    %c0_i32_0 = arith.constant 0 : i32
    return %arg0, %c0_i32 : i32, i32
  }
  func.func @transform_1(%arg0: i32) -> (i32, i32) {
    %c0_i32 = arith.constant 0 : i32
    %c0_i32_0 = arith.constant 0 : i32
    return %arg0, %c0_i32 : i32, i32
  }
  func.func @transform_2(%arg0: i32) -> (i32, i32) {
    %c0_i32 = arith.constant 0 : i32
    %c0_i32_0 = arith.constant 0 : i32
    return %arg0, %c0_i32 : i32, i32
  }
  func.func @transform_3(%arg0: i32) -> (i32, i32) {
    %c0_i32 = arith.constant 0 : i32
    %c0_i32_0 = arith.constant 0 : i32
    %c0_i32_1 = arith.constant 0 : i32
    return %c0_i32, %c0_i32_0 : i32, i32
  }
}

</mosaic_0001>

<llo_original>
// kernel: tpu_custom_call.1
$region0: #{tpu_custom_call.1}
  #allocation0 [shape = 'u32[]', space=smem, size = 0x4, offset = 0x4, fixed_abs, tag = 'smem constant byte address 0x4 - core index']
  #allocation1 [shape = 'u32[72,128]{1,0:T(1,128)}', space=vmem, size = 0x9000, scoped, tag = 'internal scratch']
  %s0 = inlined_call_operand.vmem [shape: f32[16,128], index: 0, kind: input, shape index: {}]
  %s1 = inlined_call_operand.vmem [shape: s32[16,1], index: 1, kind: input, shape index: {}]
  %s2 = inlined_call_operand.vmem [shape: f32[16,1], index: 2, kind: input, shape index: {}]
  %s3 = inlined_call_operand.hbm [shape: f32[8,128], index: 3, kind: output, shape index: {}]
  %s4 = sld [smem:[#allocation0]]
  $region26: #{tpu_custom_call.1} parent=0
    _
  %s6 = ssub.s32 1, %s4
  %s7 = scalar_select 0, %s6, %s4
  $region1: #{tpu_custom_call.1} parent=0
    #allocation2 [shape = 'u8[4096]{0}', space=vmem, size = 0x1000, scoped, tag = 'output window, operand 0, single buffered']
    #allocation3 [shape = 's32[1]{0}', space=sflag, size = 0x4, scoped, tag = 'scoped memory for tpu_custom_call.1']
    %8 = vsyncpa [#allocation3], 0
    // Predicated region
    $region2: #{tpu_custom_call.1} parent=1 // pred_check
      _
    $region3: #{tpu_custom_call.1} parent=1 // pred_check_branch
      %10 = sbr.rel (0) target = $region5
    $region4: #{tpu_custom_call.1} parent=1 // pred_region
      _
    $region5: #{tpu_custom_call.1} parent=1 // pred_fallthru
      _
    // Predicated region
    $region6: #{tpu_custom_call.1} parent=1 // pred_check
      _
    $region7: #{tpu_custom_call.1} parent=1 // pred_check_branch
      %12 = sbr.rel (0) target = $region9
    $region8: #{tpu_custom_call.1} parent=1 // pred_region
      _
    $region9: #{tpu_custom_call.1} parent=1 // pred_fallthru
      _
    // Predicated region
    $region10: #{tpu_custom_call.1} parent=1 // pred_check
      _
    $region11: #{tpu_custom_call.1} parent=1 // pred_check_branch
      %14 = sbr.rel (0) target = $region13
    $region12: #{tpu_custom_call.1} parent=1 // pred_region
      _
    $region13: #{tpu_custom_call.1} parent=1 // pred_fallthru
      _
    %p15 = scmp.eq.s32.totalorder 0, 0
    // Predicated region
    $region14: #{tpu_custom_call.1} parent=1 // pred_check
      %p16 = pneg %p15
    $region15: #{tpu_custom_call.1} parent=1 // pred_check_branch
      %18 = sbr.rel (%p16) target = $region17
    $region16: #{tpu_custom_call.1} parent=1 // pred_region
      %19 = vst [vmem:[#allocation2] sm:$0xff] 0.0
    $region17: #{tpu_custom_call.1} parent=1 // pred_fallthru
      _
    %v20 = vld [vmem:[%s0] sm:$0xff]
    %v21 = vld [vmem:[%s0 + $0x8] sm:$0xff]
    %v22 = vld [vmem:[%s1] sm:$0xff]
    %v23 = vld [vmem:[%s1 + $0x8] sm:$0xff]
    %v24 = vld [vmem:[%s2] sm:$0xff]
    %v25 = vld [vmem:[%s2 + $0x8] sm:$0xff]
    %26 = vmax.xlane.f32.xlu0 %v20
    %v27 = vpop.xlane.xlu0 %26
    %28 = vmax.xlane.f32.xlu0 %v21
    %v29 = vpop.xlane.xlu0 %28
    %v30 = vsub.f32 %v20, %v27
    %v31 = vsub.f32 %v21, %v29
    %v32 = vmul.f32 %v30, 1.442695
    %v33 = vpow.pop %v32
    %v34 = vmul.f32 %v31, 1.442695
    %v35 = vpow.pop %v34
    %36 = vadd.xlane.f32.xlu0 %v33
    %v37 = vpop.xlane.xlu0 %36
    %38 = vadd.xlane.f32.xlu0 %v35
    %v39 = vpop.xlane.xlu0 %38
    %v40 = vmul.f32 %v33, %v30
    %v41 = vmul.f32 %v35, %v31
    %42 = vadd.xlane.f32.xlu0 %v40
    %v43 = vpop.xlane.xlu0 %42
    %44 = vadd.xlane.f32.xlu0 %v41
    %v45 = vpop.xlane.xlu0 %44
    %v46 = vlog2.pop %v37
    %v47 = vmul.f32 %v46, 0.6931472
    %v48 = vlog2.pop %v39
    %v49 = vmul.f32 %v48, 0.6931472
    %v50 = vrcp.pop %v37
    %v51 = vmul.f32 %v37, %v50
    %v52 = vsub.f32 1.0, %v51
    %v53 = vmul.f32 %v50, %v52
    %v54 = vadd.f32 %v50, %v53
    %vm55 = vweird.f32 %v37
    %vm56 = vweird.f32 %v50
    %vm57 = vmor %vm55, %vm56
    %v58 = vsel %vm57, %v50, %v54
    %v59 = vand.u32 2147483647, %v37
    %vm60 = vcmp.eq.f32.partialorder %v59, 8.507059e+37
    %v61 = vand.u32 %v37, 2147483648
    %v62 = vor.u32 1.1754944e-38, %v61
    %v63 = vsel %vm60, %v62, %v58
    %v64 = vrcp.pop %v39
    %v65 = vmul.f32 %v39, %v64
    %v66 = vsub.f32 1.0, %v65
    %v67 = vmul.f32 %v64, %v66
    %v68 = vadd.f32 %v64, %v67
    %vm69 = vweird.f32 %v39
    %vm70 = vweird.f32 %v64
    %vm71 = vmor %vm69, %vm70
    %v72 = vsel %vm71, %v64, %v68
    %v73 = vand.u32 2147483647, %v39
    %vm74 = vcmp.eq.f32.partialorder %v73, 8.507059e+37
    %v75 = vand.u32 %v39, 2147483648
    %v76 = vor.u32 1.1754944e-38, %v75
    %v77 = vsel %vm74, %v76, %v72
    %v78 = vmul.f32 %v43, %v63
    %v79 = vmul.f32 %v45, %v77
    %v80 = vsub.f32 %v47, %v78
    %v81 = vsub.f32 %v49, %v79
    %v82 = vlaneseq
    %v83 = vand.u32 %v82, 127
    %84 = vset.pattern.permute.xlu0 0
    %85 = vperm.xlu0 %84, %v22
    %v86 = vpop.permute.xlu0 %85
    %87 = vset.pattern.permute.xlu0 0
    %88 = vperm.xlu0 %87, %v23
    %v89 = vpop.permute.xlu0 %88
    %vm90 = vcmp.eq.s32.totalorder %v83, %v86
    %vm91 = vcmp.eq.s32.totalorder %v83, %v89
    %v92 = vsel %vm90, %v30, 0.0
    %v93 = vsel %vm91, %v31, 0.0
    %94 = vadd.xlane.f32.xlu0 %v92
    %v95 = vpop.xlane.xlu0 %94
    %96 = vadd.xlane.f32.xlu0 %v93
    %v97 = vpop.xlane.xlu0 %96
    %v98 = vsub.f32 %v47, %v95
    %v99 = vsub.f32 %v49, %v97
    %v100 = vmul.f32 %v24, %v80
    %v101 = vmul.f32 %v25, %v81
    %v102 = vsub.f32 %v98, %v100
    %v103 = vsub.f32 %v99, %v101
    %s104 = smul.u32 0, 16
    %v105 = vlaneseq
    %v106 = vshrl.u32 %v105, 7
    %v107 = vadd.s32 %v106, 8
    %v108 = vstv %s104
    %v109 = vadd.s32 %v108, %v106
    %v110 = vadd.s32 %v108, %v107
    %vm111 = vcmp.lt.s32.totalorder %v109, 16
    %vm112 = vcmp.lt.s32.totalorder %v110, 16
    %v113 = vsel %vm111, %v102, 0.0
    %v114 = vsel %vm112, %v103, 0.0
    %v115 = vld [vmem:[#allocation2] sm:$0xff]
    %vm116 = vcmask 7168
    %v117 = vsel %vm116, %v113, 0.0
    %v118 = vsel %vm116, %v114, 0.0
    %v119 = vadd.f32 %v117, %v118
    %120 = vadd.xlane.f32.xlu0 %v119
    %v121 = vpop.xlane.xlu0 %120
    %v122 = vrot.slane %v121, 4
    %v123 = vadd.f32 %v121, %v122
    %v124 = vrot.slane %v123, 2
    %v125 = vadd.f32 %v123, %v124
    %v126 = vrot.slane %v125, 1
    %v127 = vadd.f32 %v125, %v126
    %s128 = vtos %v127
    %v129 = vstv %s128
    %v130 = vadd.f32 %v115, %v129
    %131 = vst [vmem:[#allocation2] sm:$0xff] %v130
    // Predicated region
    $region18: #{tpu_custom_call.1} parent=1 // pred_check
      _
    $region19: #{tpu_custom_call.1} parent=1 // pred_check_branch
      %133 = sbr.rel (0) target = $region21
    $region20: #{tpu_custom_call.1} parent=1 // pred_region
      %135 = vsyncadd [#allocation3], 0
      %s137 = sshll.u32 [#allocation2], 4
      %s138 = int_to_ptr.vmem [resolvable:$true] %s137
      %s139 = sshll.u32 %s3, 4
      %s140 = int_to_ptr.hbm [resolvable:$true] %s139
      %142 = dma.vmem_to_hbm [thread:$0]  %s138, 128, %s140, [#allocation3]
    $region21: #{tpu_custom_call.1} parent=1 // pred_fallthru
      _
    // Predicated region
    $region22: #{tpu_custom_call.1} parent=1 // pred_check
      _
    $region23: #{tpu_custom_call.1} parent=1 // pred_check_branch
      %144 = sbr.rel (0) target = $region25
    $region24: #{tpu_custom_call.1} parent=1 // pred_region
      %146 = dma.done [#allocation3], 128
    $region25: #{tpu_custom_call.1} parent=1 // pred_fallthru
      _
    %147 = vsyncpa [#allocation3], 1

</llo_original>
